<compile_context>
chip_gen: v7x
topology: tpu7x:2x2x1
jax: 0.10.0
libtpu: 0.0.40
codegen_flags: <defaults>
</compile_context>

<pallas_src>
import jax
import jax.numpy as jnp
from jax.experimental import pallas as pl
from jax.experimental.pallas import tpu as pltpu

BITS = 8  # BIT_TYPE_DICT['int8'].bits


def _tpu_vmem_capacity_bytes():
    """Physical VMEM per TensorCore; falls back to 128 MiB (v5e/v6e)."""
    try:
        info = pltpu.get_tpu_info()
        cap = getattr(info, "vmem_capacity_bytes", None)
        if cap:
            return int(cap)
    except Exception:
        pass
    return 128 * 1024 * 1024


_VMEM_PHYS = _tpu_vmem_capacity_bytes()
_IS_SMALL_VMEM = _VMEM_PHYS <= 64 * 1024 * 1024           # v7x-like chip
# 64 MiB scoped VMEM on 128-MiB chips (v5e/v6e), ~48 MiB on v7x (64 MiB phys).
_VMEM_LIMIT_BYTES = min(64 * 1024 * 1024, (_VMEM_PHYS * 3) // 4)
# Plain softmax is HBM-bound: bigger blocks on v7x so the ~0.35us/step fixed
# cost stays small relative to the (fast) DMA.  The int kernel keeps ~4-6 live
# full-tile f32 temporaries, so it stays at 2 MiB everywhere.
_PLAIN_BLOCK_BYTES = (4 if _IS_SMALL_VMEM else 2) * 1024 * 1024
_INT_BLOCK_BYTES = 2 * 1024 * 1024


def _row_tile(n_rows, n_cols, itemsize, target_bytes):
    """Row tile sized purely from the byte budget (f32-accounted), sublane
    aligned for the input dtype, and always split into >= 2 grid steps when
    possible so both TensorCores on v7x get work."""
    sublane = 8 if itemsize >= 4 else (16 if itemsize == 2 else 32)
    per_row = n_cols * max(itemsize, 4)        # kernel math is f32
    tile = max(1, target_bytes // max(per_row, 1))
    # Keep at least 2 grid steps (megacore sharding on v7x); negligible cost
    # (one extra pipeline step) on single-TC chips.
    tile = min(tile, max(sublane, n_rows // 2))
    tile = max(sublane, (tile // sublane) * sublane)
    return min(tile, n_rows)


# ---------------------------------------------------------------------------
# Kernel 1: plain softmax over the last axis (log_i_softmax=False branch,
# quant=False / calibrate=False defaults).
# ---------------------------------------------------------------------------
def _softmax_kernel(x_ref, o_ref):
    x = x_ref[...].astype(jnp.float32)
    m = jnp.max(x, axis=-1, keepdims=True)
    e = jnp.exp(x - m)
    n = e.shape[-1]
    if n % 128 == 0:
        # Row sum on the otherwise idle MXU (dot with a ones column).  Frees
        # the XLU cross-lane-reduce slot, which becomes the binding unit once
        # HBM is fast enough (v7x); neutral on v5e/v6e where HBM limits.
        ones_col = jnp.ones((n, 1), dtype=jnp.float32)
        s = jnp.dot(e, ones_col, preferred_element_type=jnp.float32)
    else:
        s = jnp.sum(e, axis=-1, keepdims=True)
    # Approx reciprocal on the (TR, 1) column (EUP), then a VALU multiply on
    # the full tile: frees the single EUP slot for the exp().
    o_ref[...] = (e * pl.reciprocal(s, approx=True)).astype(o_ref.dtype)


# ---------------------------------------------------------------------------
# Kernel 2: integer softmax (I-BERT style) + log2 rounding branch
# (log_i_softmax=True and scale is not None).
# ---------------------------------------------------------------------------
def _int_softmax_kernel(scale_ref, x_ref, o_ref):
    sf = scale_ref[0]          # scalar scaling factor (SMEM scalar prefetch)
    inv_sf = 1.0 / sf          # scalar-unit reciprocal, reused as multiplies

    x = x_ref[...].astype(jnp.float32)

    # x_int = x / scale ; subtract per-row max
    x_int = x * inv_sf
    x_int = x_int - jnp.max(x_int, axis=-1, keepdims=True)

    # ---- int_exp ----
    x0 = -0.6931
    n = 30
    x0_int = jnp.floor(x0 * inv_sf)        # scalar
    inv_x0_int = 1.0 / x0_int              # scalar
    x_int = jnp.maximum(x_int, n * x0_int)
    q = jnp.floor(x_int * inv_x0_int)      # integer-valued float in [0, n]
    r = x_int - x0_int * q

    # ---- int_polynomial ----
    coef0 = 0.35815147
    b_int = jnp.floor((0.96963238 / coef0) * inv_sf)
    c_int = jnp.floor((1.0 / coef0) * inv_sf * inv_sf)
    z = r * (r + b_int) + c_int

    # exp_int = clamp(floor(z * 2^(n - q)), 0)
    # 2^(n-q) built by writing the f32 exponent field (q integer in [0, n])
    # instead of a full-tile exp2 on the single-slot EUP.
    shift_i = (n - q).astype(jnp.int32)                       # in [0, n]
    pow_nq = pltpu.bitcast((shift_i + 127) << 23, jnp.float32)
    exp_int = jnp.maximum(jnp.floor(z * pow_nq), 0.0)
    exp_int_sum = jnp.sum(exp_int, axis=-1, keepdims=True)

    # softmax_out = round(sum / exp_int).  The full-tile f32 divide is the
    # most expensive per-element op here; replace it with an approx
    # reciprocal (EUP) + one Newton step (VALU), and mask exp_int == 0
    # explicitly instead of relying on inf propagation.
    zero = exp_int == 0.0
    safe = jnp.where(zero, 1.0, exp_int)
    rcp = pl.reciprocal(safe, approx=True)
    rcp = rcp * (2.0 - safe * rcp)               # one Newton step (~f32 exact)
    softmax_out = jnp.round(exp_int_sum * rcp)   # >= 1.0 on valid elements

    # ---- log_round via exponent/mantissa bit fields (no log2 / exp2) ----
    so_bits = pltpu.bitcast(softmax_out, jnp.int32)
    big_i = (so_bits >> 23) - 127                 # floor(log2(softmax_out))
    # top mantissa bit  <=>  (x - 2^big) >= 2^(big-1)
    extra = (so_bits >> 22) & 1
    rounds_i = big_i + extra

    # mask: reference masks rounds >= 2^bits; zero-exp_int elements are masked
    # explicitly; big_i >= 128 guards a (pathological) inf exp_int_sum.
    mask = (rounds_i >= 2 ** BITS) | zero | (big_i >= 128)
    qlog = jnp.clip(rounds_i, 0, 2 ** BITS - 1)

    # deq = 2^(-qlog), again via the exponent field.  qlog > 126 would be a
    # subnormal (<= 2^-127); treat as 0 (only reachable in pathological
    # regimes, and masked elements are zeroed anyway).
    exp_field = jnp.clip(127 - qlog, 0, 254)
    deq = pltpu.bitcast(exp_field << 23, jnp.float32)
    deq = jnp.where(mask | (qlog > 126), 0.0, deq)
    o_ref[...] = deq.astype(o_ref.dtype)


# ---------------------------------------------------------------------------
# Wrappers
# ---------------------------------------------------------------------------
def _softmax_pallas(x):
    orig_shape = x.shape
    N = orig_shape[-1]
    R = x.size // N
    x2 = x.reshape(R, N)
    TR = _row_tile(R, N, x.dtype.itemsize, _PLAIN_BLOCK_BYTES)
    nbytes = x2.size * x2.dtype.itemsize
    # TODO(synk): for N < 128 (lane-sparse stores) pack multiple softmax groups
    # per lane row; production attention N is a multiple of 128 so left as is.
    out = pl.pallas_call(
        _softmax_kernel,
        out_shape=jax.ShapeDtypeStruct((R, N), x.dtype),
        grid_spec=pl.GridSpec(
            grid=(pl.cdiv(R, TR),),
            in_specs=[pl.BlockSpec((TR, N), lambda i: (i, 0))],
            out_specs=pl.BlockSpec((TR, N), lambda i: (i, 0)),
        ),
        compiler_params=pltpu.CompilerParams(
            dimension_semantics=("parallel",),
            vmem_limit_bytes=_VMEM_LIMIT_BYTES,
        ),
        cost_estimate=pl.CostEstimate(
            flops=5 * R * N, transcendentals=R * N, bytes_accessed=2 * nbytes),
    )(x2)
    return out.reshape(orig_shape)


def _int_log_softmax_pallas(x, scale):
    orig_shape = x.shape
    N = orig_shape[-1]
    R = x.size // N
    x2 = x.reshape(R, N)                  # no wrapper-side upcast; kernel casts
    scale_arr = jnp.asarray(scale, jnp.float32).reshape(1)
    TR = _row_tile(R, N, x.dtype.itemsize, _INT_BLOCK_BYTES)
    nbytes = x2.size * x2.dtype.itemsize
    out = pl.pallas_call(
        _int_softmax_kernel,
        out_shape=jax.ShapeDtypeStruct((R, N), x.dtype),  # powers of 2: lossless
        grid_spec=pltpu.PrefetchScalarGridSpec(
            num_scalar_prefetch=1,
            grid=(pl.cdiv(R, TR),),
            in_specs=[pl.BlockSpec((TR, N), lambda i, s: (i, 0))],
            out_specs=pl.BlockSpec((TR, N), lambda i, s: (i, 0)),
        ),
        compiler_params=pltpu.CompilerParams(
            dimension_semantics=("parallel",),
            vmem_limit_bytes=_VMEM_LIMIT_BYTES,
        ),
        cost_estimate=pl.CostEstimate(
            flops=25 * R * N, transcendentals=R * N, bytes_accessed=2 * nbytes),
    )(scale_arr, x2)
    return out.reshape(orig_shape)


class QIntSoftmax:
    """JAX/Pallas mirror of the PyTorch QIntSoftmax module's forward pass."""

    def __init__(self, log_i_softmax=False, quant=False, calibrate=False,
                 last_calibrate=False, bits=BITS):
        self.log_i_softmax = log_i_softmax
        self.quant = quant
        self.calibrate = calibrate
        self.last_calibrate = last_calibrate
        self.bits = bits
        # No learnable parameters; the observer/quantizer only hold
        # calibration statistics (unused with default flags).

    def __call__(self, x, scale=None):
        if self.log_i_softmax and scale is not None:
            return _int_log_softmax_pallas(x, scale)
        out = _softmax_pallas(x)
        # TODO(synk): observer/quantizer (build_observer/build_quantizer) path
        # for quant=True / calibrate=True is not implemented; defaults are
        # False so the plain softmax output is returned, matching the spec.
        # TODO(synk): the biggest structural win is fusing this softmax into a
        # flash-style attention kernel so the score matrix never round-trips
        # HBM; that is a call-site change, not a change to this module.
        return out


# ---------------------------------------------------------------------------
# Pure-JAX reference of the torch code path (for a sanity check only).
# ---------------------------------------------------------------------------
def _int_log_softmax_reference(x, scale):
    sf = jnp.float32(scale)
    x = x.astype(jnp.float32)
    x_int = x / sf
    x_int = x_int - jnp.max(x_int, axis=-1, keepdims=True)
    x0_int = jnp.floor(-0.6931 / sf)
    x_int = jnp.maximum(x_int, 30.0 * x0_int)
    q = jnp.floor(x_int / x0_int)
    r = x_int - x0_int * q
    coef0 = 0.35815147
    b_int = jnp.floor((0.96963238 / coef0) / sf)
    c_int = jnp.floor((1.0 / coef0) / (sf * sf))
    z = r * (r + b_int) + c_int
    exp_int = jnp.maximum(jnp.floor(z * jnp.exp2(30.0 - q)), 0.0)
    exp_int_sum = jnp.sum(exp_int, axis=-1, keepdims=True)
    so = jnp.round(exp_int_sum / exp_int)
    big = jnp.floor(jnp.log2(so))
    extra = (so - jnp.exp2(big)) >= jnp.exp2(big - 1.0)
    rounds = jnp.where(extra, big + 1.0, big)
    mask = rounds >= 2.0 ** BITS
    qlog = jnp.clip(rounds, 0.0, 2.0 ** BITS - 1.0)
    deq = jnp.exp2(-qlog)
    return jnp.where(mask, 0.0, deq)


if __name__ == "__main__":
    import numpy as np

    key = jax.random.PRNGKey(0)
    k1, k2 = jax.random.split(key)
    x = jax.random.normal(k1, (2, 4, 16, 16), dtype=jnp.float32)
    # Second shape with N=128 to exercise the MXU row-sum path in the plain kernel.
    x_wide = jax.random.normal(k2, (2, 4, 16, 128), dtype=jnp.float32)

    # Default branch: plain softmax over the last axis.
    m_plain = QIntSoftmax()
    y_plain = m_plain(x, None)
    y_wide = m_plain(x_wide, None)
    jax.block_until_ready((y_plain, y_wide))
    ref_plain = jax.nn.softmax(x, axis=-1)
    ref_wide = jax.nn.softmax(x_wide, axis=-1)
    assert np.allclose(np.asarray(y_plain), np.asarray(ref_plain),
                       rtol=1e-2, atol=1e-2), "plain softmax mismatch"
    assert np.allclose(np.asarray(y_wide), np.asarray(ref_wide),
                       rtol=1e-2, atol=1e-2), "plain softmax (wide) mismatch"

    # Integer log-softmax branch.
    m_int = QIntSoftmax(log_i_softmax=True)
    y_int = m_int(x, 0.02)
    jax.block_until_ready(y_int)
    ref_int = _int_log_softmax_reference(x, 0.02)
    close = np.isclose(np.asarray(y_int), np.asarray(ref_int),
                       rtol=1e-3, atol=1e-30)
    # Tolerate rare 1-ulp floor/round boundary flips from the
    # reciprocal-multiply rewrites; outputs are otherwise exact powers of two.
    assert np.mean(close) > 0.99, f"int softmax match fraction {np.mean(close)}"

    print("KERNEL_OK")
</pallas_src>

<mosaic_0001>
module attributes {stable_mosaic.version = 11 : i64} {
  func.func @_softmax_kernel(%arg0: i32, %arg1: memref<64x16xf32, #tpu.memory_space<vmem>>, %arg2: memref<64x16xf32, #tpu.memory_space<vmem>>) attributes {dimension_semantics = [#tpu.dimension_semantics<parallel>], iteration_bounds = array<i64: 2>, scalar_prefetch = 0 : i64, scratch_operands = 0 : i64, tpu.core_type = #tpu.core_type<tc>, window_params = [{transform_indices = @transform_0, window_bounds = array<i64: 64, 16>}, {transform_indices = @transform_1, window_bounds = array<i64: 64, 16>}]} {
    %c0 = arith.constant 0 : index
    %c0_0 = arith.constant 0 : index
    %0 = vector.load %arg1[%c0, %c0_0] : memref<64x16xf32, #tpu.memory_space<vmem>>, vector<64x16xf32>
    %cst = arith.constant dense<0xFF800000> : vector<64xf32>
    %1 = vector.multi_reduction <maximumf>, %0, %cst [1] : vector<64x16xf32> to vector<64xf32>
    %2 = vector.shape_cast %1 : vector<64xf32> to vector<64x1xf32>
    %3 = vector.broadcast %2 : vector<64x1xf32> to vector<64x16xf32>
    %4 = arith.subf %0, %3 : vector<64x16xf32>
    %5 = math.exp %4 : vector<64x16xf32>
    %cst_1 = arith.constant dense<0.000000e+00> : vector<64xf32>
    %6 = vector.multi_reduction <add>, %5, %cst_1 [1] : vector<64x16xf32> to vector<64xf32>
    %7 = vector.shape_cast %6 : vector<64xf32> to vector<64x1xf32>
    %8 = tpu.reciprocal %7 {approx = true} : vector<64x1xf32> -> vector<64x1xf32>
    %9 = vector.broadcast %8 : vector<64x1xf32> to vector<64x16xf32>
    %10 = arith.mulf %5, %9 : vector<64x16xf32>
    %c0_2 = arith.constant 0 : index
    %c0_3 = arith.constant 0 : index
    %11 = vector.load %arg2[%c0_2, %c0_3] : memref<64x16xf32, #tpu.memory_space<vmem>>, vector<64x16xf32>
    tpu.vector_store %arg2[%c0_2, %c0_3], %10 {strides = array<i32>} : memref<64x16xf32, #tpu.memory_space<vmem>>, vector<64x16xf32>,
    return
  }
  func.func @transform_0(%arg0: i32) -> (i32, i32) {
    %c0_i32 = arith.constant 0 : i32
    %c0_i32_0 = arith.constant 0 : i32
    return %arg0, %c0_i32 : i32, i32
  }
  func.func @transform_1(%arg0: i32) -> (i32, i32) {
    %c0_i32 = arith.constant 0 : i32
    %c0_i32_0 = arith.constant 0 : i32
    return %arg0, %c0_i32 : i32, i32
  }
}

</mosaic_0001>

<llo_original>
// kernel: tpu_custom_call.1
$region0: #{tpu_custom_call.1}
  #allocation0 [shape = 'u32[]', space=smem, size = 0x4, offset = 0x4, fixed_abs, tag = 'smem constant byte address 0x4 - core index']
  #allocation1 [shape = 'u32[144,128]{1,0:T(1,128)}', space=vmem, size = 0x12000, scoped, tag = 'internal scratch']
  %s0 = inlined_call_operand.hbm [shape: f32[128,16], index: 0, kind: input, shape index: {}]
  %s1 = inlined_call_operand.hbm [shape: f32[128,16], index: 1, kind: output, shape index: {}]
  %s2 = sld [smem:[#allocation0]]
  $region41: #{tpu_custom_call.1} parent=0
    _
  %s4 = ssub.s32 1, %s2
  %s5 = scalar_select 0, %s4, %s2
  $region1: #{tpu_custom_call.1} parent=0
    #allocation2 [shape = 'u8[65536]{0}', space=vmem, size = 0x10000, scoped, tag = 'input window, operand 0']
    #allocation3 [shape = 's32[2]{0}', space=sflag, size = 0x8, scoped, tag = 'scoped memory for tpu_custom_call.1']
    #allocation4 [shape = 's32[2]{0}', space=sflag, size = 0x8, scoped, tag = 'scoped memory for tpu_custom_call.1']
    #allocation5 [shape = 'u8[65536]{0}', space=vmem, size = 0x10000, scoped, tag = 'output window, operand 0']
    %6 = vsyncpa [#allocation3], 0
    %s7 = scalar_lea.sflag [#allocation3], 1
    %8 = vsyncpa %s7, 0
    %9 = vsyncpa [#allocation4], 0
    %s10 = scalar_lea.sflag [#allocation4], 1
    %11 = vsyncpa %s10, 0
    loop: start=0, step=1, limit=4
    $region2: #{tpu_custom_call.1} parent=1 // loop_pre_header
      _
    $region3: #{tpu_custom_call.1} parent=1 // loop_header
      %s13 = sphi 0, %s17
      %p14 = scmp.ge.s32.totalorder %s13, 4
      %s23 = sphi 0, %s25
      %s26 = sphi 0, %s23
      %s27 = sphi 0, %s26
      %s43 = sphi 0, %s27
      %s49 = sphi 0, %s51
      %s52 = sphi 0, %s49
      %s53 = sphi 0, %s52
      %s69 = sphi 0, %s53
    $region4: #{tpu_custom_call.1} parent=1 // loop_header_branch
      %16 = sbr.rel (%p14) target = $region8
    $region5: #{tpu_custom_call.1} parent=1 // loop_body
      %s18 = ssub.s32 %s13, 1
      %s19 = ssub.s32 %s13, 2
      %s20 = sadd.s32 %s13, 1
      %s21 = ssub.s32 %s13, %s20
      %p22 = scmp.eq.s32.totalorder %s21, 0
      %s24 = sadd.s32 %s23, 1
      %s25 = scalar_select %p22, %s23, %s24
      %p28 = pneg %p22
      %p29 = scmp.eq.s32.totalorder %s13, 1
      %p30 = por %p28, %p29
      %p31 = scmp.ne.s32.totalorder %s23, %s26
      %p32 = scmp.eq.s32.totalorder %s13, 0
      %p33 = por %p31, %p32
      %p34 = scmp.ne.s32.totalorder %s23, %s26
      %p35 = scmp.eq.s32.totalorder %s18, 1
      %p36 = por %p34, %p35
      %p37 = scmp.ne.s32.totalorder %s26, %s27
      %p38 = scmp.eq.s32.totalorder %s18, 0
      %p39 = por %p37, %p38
      %p40 = scmp.ne.s32.totalorder %s26, %s27
      %p41 = scmp.eq.s32.totalorder %s19, 1
      %p42 = por %p40, %p41
      %p44 = scmp.ne.s32.totalorder %s27, %s43
      %p45 = scmp.eq.s32.totalorder %s19, 0
      %p46 = por %p44, %p45
      %s47 = ssub.s32 %s13, %s20
      %p48 = scmp.eq.s32.totalorder %s47, 0
      %s50 = sadd.s32 %s49, 1
      %s51 = scalar_select %p48, %s49, %s50
      %p54 = pneg %p48
      %p55 = scmp.eq.s32.totalorder %s13, 1
      %p56 = por %p54, %p55
      %p57 = scmp.ne.s32.totalorder %s49, %s52
      %p58 = scmp.eq.s32.totalorder %s13, 0
      %p59 = por %p57, %p58
      %p60 = scmp.ne.s32.totalorder %s49, %s52
      %p61 = scmp.eq.s32.totalorder %s18, 1
      %p62 = por %p60, %p61
      %p63 = scmp.ne.s32.totalorder %s52, %s53
      %p64 = scmp.eq.s32.totalorder %s18, 0
      %p65 = por %p63, %p64
      %p66 = scmp.ne.s32.totalorder %s52, %s53
      %p67 = scmp.eq.s32.totalorder %s19, 1
      %p68 = por %p66, %p67
      %p70 = scmp.ne.s32.totalorder %s53, %s69
      %p71 = scmp.eq.s32.totalorder %s19, 0
      %p72 = por %p70, %p71
      %p73 = scmp.le.s32.totalorder 1, %s13
      %p74 = scmp.lt.s32.totalorder %s13, 3
      %p75 = pnand %p73, %p74
      %p76 = pneg %p75
      // Predicated region
      $region9: #{tpu_custom_call.1} parent=5 // pred_check
        _
      $region10: #{tpu_custom_call.1} parent=5 // pred_check_branch
        %78 = sbr.rel (%p75) target = $region12
      $region11: #{tpu_custom_call.1} parent=5 // pred_region
        %s79 = ssub.s32 %s13, 1
      $region12: #{tpu_custom_call.1} parent=5 // pred_fallthru
        _
      %p80 = scmp.lt.s32.totalorder %s13, 2
      // Predicated region
      $region13: #{tpu_custom_call.1} parent=5 // pred_check
        %p81 = pneg %p80
      $region14: #{tpu_custom_call.1} parent=5 // pred_check_branch
        %83 = sbr.rel (%p81) target = $region16
      $region15: #{tpu_custom_call.1} parent=5 // pred_region
        // Predicated region
        $region17: #{tpu_custom_call.1} parent=15 // pred_check
          %p84 = pneg %p33
        $region18: #{tpu_custom_call.1} parent=15 // pred_check_branch
          %86 = sbr.rel (%p84) target = $region20
        $region19: #{tpu_custom_call.1} parent=15 // pred_region
          %s87 = sand.u32 %s23, 1
          %s88 = scalar_lea.sflag [#allocation3], %s87
          %s89 = sand.u32 %s23, 1
          %s90 = smul.addr %s89, 64
          %s91 = scalar_lea.vmem [#allocation2], %s90
          %s92 = smul.u32 8, %s13
          %s94 = ssub.s32 1024, 1024
          %95 = vsyncadd %s88, %s94
          %s96 = smul.addr %s92, 128
          %s97 = scalar_lea.hbm %s0, %s96
          %s98 = sshll.u32 %s91, 4
          %s99 = int_to_ptr.vmem [resolvable:$true] %s98
          %104 = dma.hbm_to_vmem [thread:$0]  %s97, 1024, %s99, %s88, 128, 128, 8
        $region20: #{tpu_custom_call.1} parent=15 // pred_fallthru
          _
      $region16: #{tpu_custom_call.1} parent=5 // pred_fallthru
        _
      %p105 = scmp.le.s32.totalorder 1, %s13
      %p106 = scmp.lt.s32.totalorder %s13, 3
      %p107 = pnand %p105, %p106
      %p108 = pneg %p107
      // Predicated region
      $region21: #{tpu_custom_call.1} parent=5 // pred_check
        _
      $region22: #{tpu_custom_call.1} parent=5 // pred_check_branch
        %110 = sbr.rel (%p107) target = $region24
      $region23: #{tpu_custom_call.1} parent=5 // pred_region
        %s111 = ssub.s32 %s13, 1
        %s112 = sand.u32 %s26, 1
        %s113 = scalar_lea.sflag [#allocation3], %s112
        %s114 = sand.u32 %s26, 1
        %s115 = smul.addr %s114, 64
        %s116 = scalar_lea.vmem [#allocation2], %s115
        // Predicated region
        $region25: #{tpu_custom_call.1} parent=23 // pred_check
          %p117 = pneg %p39
        $region26: #{tpu_custom_call.1} parent=23 // pred_check_branch
          %119 = sbr.rel (%p117) target = $region28
        $region27: #{tpu_custom_call.1} parent=23 // pred_region
          %120 = dma.done %s113, 1024
        $region28: #{tpu_custom_call.1} parent=23 // pred_fallthru
          _
        %s121 = sand.u32 %s26, 1
        %s122 = scalar_lea.sflag [#allocation3], %s121
        %s123 = sand.u32 %s26, 1
        %s124 = smul.addr %s123, 64
        %s125 = scalar_lea.vmem [#allocation2], %s124
        %p126 = pneg %p39
        %p127 = pneg %p36
        %p128 = pneg %p65
        %p129 = pneg %p62
        %s130 = sand.u32 %s52, 1
        %s131 = scalar_lea.sflag [#allocation4], %s130
        %s132 = sand.u32 %s52, 1
        %s133 = smul.addr %s132, 64
        %s134 = scalar_lea.vmem [#allocation5], %s133
        %s135 = smul.u32 8, %s18
        %s136 = smul.u32 8, %s18
        %v137 = vld [vmem:[%s116] sm:$0xff]
        %v138 = vld [vmem:[%s116 + $0x8] sm:$0xff]
        %v139 = vld [vmem:[%s116 + $0x10] sm:$0xff]
        %v140 = vld [vmem:[%s116 + $0x18] sm:$0xff]
        %v141 = vld [vmem:[%s116 + $0x20] sm:$0xff]
        %v142 = vld [vmem:[%s116 + $0x28] sm:$0xff]
        %v143 = vld [vmem:[%s116 + $0x30] sm:$0xff]
        %v144 = vld [vmem:[%s116 + $0x38] sm:$0xff]
        %vm145 = vcmask 130048
        %v146 = vsel %vm145, %v137, -inf
        %147 = vmax.xlane.f32.xlu0 %v146
        %v148 = vpop.xlane.xlu0 %147
        %v149 = vsel %vm145, %v138, -inf
        %150 = vmax.xlane.f32.xlu0 %v149
        %v151 = vpop.xlane.xlu0 %150
        %v152 = vsel %vm145, %v139, -inf
        %153 = vmax.xlane.f32.xlu0 %v152
        %v154 = vpop.xlane.xlu0 %153
        %v155 = vsel %vm145, %v140, -inf
        %156 = vmax.xlane.f32.xlu0 %v155
        %v157 = vpop.xlane.xlu0 %156
        %v158 = vsel %vm145, %v141, -inf
        %159 = vmax.xlane.f32.xlu0 %v158
        %v160 = vpop.xlane.xlu0 %159
        %v161 = vsel %vm145, %v142, -inf
        %162 = vmax.xlane.f32.xlu0 %v161
        %v163 = vpop.xlane.xlu0 %162
        %v164 = vsel %vm145, %v143, -inf
        %165 = vmax.xlane.f32.xlu0 %v164
        %v166 = vpop.xlane.xlu0 %165
        %v167 = vsel %vm145, %v144, -inf
        %168 = vmax.xlane.f32.xlu0 %v167
        %v169 = vpop.xlane.xlu0 %168
        %v170 = vsub.f32 %v137, %v148
        %v171 = vsub.f32 %v138, %v151
        %v172 = vsub.f32 %v139, %v154
        %v173 = vsub.f32 %v140, %v157
        %v174 = vsub.f32 %v141, %v160
        %v175 = vsub.f32 %v142, %v163
        %v176 = vsub.f32 %v143, %v166
        %v177 = vsub.f32 %v144, %v169
        %v178 = vmul.f32 %v170, 1.442695
        %v179 = vpow.pop %v178
        %v180 = vmul.f32 %v171, 1.442695
        %v181 = vpow.pop %v180
        %v182 = vmul.f32 %v172, 1.442695
        %v183 = vpow.pop %v182
        %v184 = vmul.f32 %v173, 1.442695
        %v185 = vpow.pop %v184
        %v186 = vmul.f32 %v174, 1.442695
        %v187 = vpow.pop %v186
        %v188 = vmul.f32 %v175, 1.442695
        %v189 = vpow.pop %v188
        %v190 = vmul.f32 %v176, 1.442695
        %v191 = vpow.pop %v190
        %v192 = vmul.f32 %v177, 1.442695
        %v193 = vpow.pop %v192
        %v194 = vsel %vm145, %v179, 0.0
        %195 = vadd.xlane.f32.xlu0 %v194
        %v196 = vpop.xlane.xlu0 %195
        %v197 = vsel %vm145, %v181, 0.0
        %198 = vadd.xlane.f32.xlu0 %v197
        %v199 = vpop.xlane.xlu0 %198
        %v200 = vsel %vm145, %v183, 0.0
        %201 = vadd.xlane.f32.xlu0 %v200
        %v202 = vpop.xlane.xlu0 %201
        %v203 = vsel %vm145, %v185, 0.0
        %204 = vadd.xlane.f32.xlu0 %v203
        %v205 = vpop.xlane.xlu0 %204
        %v206 = vsel %vm145, %v187, 0.0
        %207 = vadd.xlane.f32.xlu0 %v206
        %v208 = vpop.xlane.xlu0 %207
        %v209 = vsel %vm145, %v189, 0.0
        %210 = vadd.xlane.f32.xlu0 %v209
        %v211 = vpop.xlane.xlu0 %210
        %v212 = vsel %vm145, %v191, 0.0
        %213 = vadd.xlane.f32.xlu0 %v212
        %v214 = vpop.xlane.xlu0 %213
        %v215 = vsel %vm145, %v193, 0.0
        %216 = vadd.xlane.f32.xlu0 %v215
        %v217 = vpop.xlane.xlu0 %216
        %v218 = vrcp.pop %v196
        %v219 = vrcp.pop %v199
        %v220 = vrcp.pop %v202
        %v221 = vrcp.pop %v205
        %v222 = vrcp.pop %v208
        %v223 = vrcp.pop %v211
        %v224 = vrcp.pop %v214
        %v225 = vrcp.pop %v217
        %v226 = vmul.f32 %v179, %v218
        %v227 = vmul.f32 %v181, %v219
        %v228 = vmul.f32 %v183, %v220
        %v229 = vmul.f32 %v185, %v221
        %v230 = vmul.f32 %v187, %v222
        %v231 = vmul.f32 %v189, %v223
        %v232 = vmul.f32 %v191, %v224
        %v233 = vmul.f32 %v193, %v225
        %234 = vst.msk [vmem:[%s134] sm:$0xff] %vm145, %v226
        %235 = vst.msk [vmem:[%s134 + $0x8] sm:$0xff] %vm145, %v227
        %236 = vst.msk [vmem:[%s134 + $0x10] sm:$0xff] %vm145, %v228
        %237 = vst.msk [vmem:[%s134 + $0x18] sm:$0xff] %vm145, %v229
        %238 = vst.msk [vmem:[%s134 + $0x20] sm:$0xff] %vm145, %v230
        %239 = vst.msk [vmem:[%s134 + $0x28] sm:$0xff] %vm145, %v231
        %240 = vst.msk [vmem:[%s134 + $0x30] sm:$0xff] %vm145, %v232
        %241 = vst.msk [vmem:[%s134 + $0x38] sm:$0xff] %vm145, %v233
        %s242 = sand.u32 %s52, 1
        %s243 = scalar_lea.sflag [#allocation4], %s242
        %s244 = sand.u32 %s52, 1
        %s245 = smul.addr %s244, 64
        %s246 = scalar_lea.vmem [#allocation5], %s245
        // Predicated region
        $region29: #{tpu_custom_call.1} parent=23 // pred_check
          %p247 = pneg %p62
        $region30: #{tpu_custom_call.1} parent=23 // pred_check_branch
          %249 = sbr.rel (%p247) target = $region32
        $region31: #{tpu_custom_call.1} parent=23 // pred_region
          %s250 = smul.u32 8, %s18
          %s252 = ssub.s32 1024, 1024
          %253 = vsyncadd %s243, %s252
          %s254 = smul.addr %s250, 128
          %s255 = scalar_lea.hbm %s1, %s254
          %s256 = sshll.u32 %s246, 4
          %s257 = int_to_ptr.vmem [resolvable:$true] %s256
          %262 = dma.vmem_to_hbm [thread:$0]  %s257, 1024, %s255, %s243, 128, 128, 8
        $region32: #{tpu_custom_call.1} parent=23 // pred_fallthru
          _
      $region24: #{tpu_custom_call.1} parent=5 // pred_fallthru
        _
      %p263 = scmp.le.s32.totalorder 2, %s13
      // Predicated region
      $region33: #{tpu_custom_call.1} parent=5 // pred_check
        %p264 = pneg %p263
      $region34: #{tpu_custom_call.1} parent=5 // pred_check_branch
        %266 = sbr.rel (%p264) target = $region36
      $region35: #{tpu_custom_call.1} parent=5 // pred_region
        %s267 = ssub.s32 %s13, 2
        // Predicated region
        $region37: #{tpu_custom_call.1} parent=35 // pred_check
          %p268 = pneg %p68
        $region38: #{tpu_custom_call.1} parent=35 // pred_check_branch
          %270 = sbr.rel (%p268) target = $region40
        $region39: #{tpu_custom_call.1} parent=35 // pred_region
          %s271 = sand.u32 %s53, 1
          %s272 = scalar_lea.sflag [#allocation4], %s271
          %s273 = sand.u32 %s53, 1
          %s274 = smul.addr %s273, 64
          %s275 = scalar_lea.vmem [#allocation5], %s274
          %276 = dma.done %s272, 1024
        $region40: #{tpu_custom_call.1} parent=35 // pred_fallthru
          _
      $region36: #{tpu_custom_call.1} parent=5 // pred_fallthru
        _
    $region6: #{tpu_custom_call.1} parent=1 // loop_footer
      %s17 = sadd.s32 1, %s13
    $region7: #{tpu_custom_call.1} parent=1 // loop_footer_branch
      %12 = sbr.rel target = $region3
    $region8: #{tpu_custom_call.1} parent=1 // loop_exit
      _
    %277 = vsyncpa [#allocation3], 1
    %s278 = scalar_lea.sflag [#allocation3], 1
    %279 = vsyncpa %s278, 1
    %280 = vsyncpa [#allocation4], 1
    %s281 = scalar_lea.sflag [#allocation4], 1
    %282 = vsyncpa %s281, 1

</llo_original>
